<compile_context>
chip_gen: v6e
topology: v6e:2x2x1
jax: 0.10.0
libtpu: 0.0.40
codegen_flags: <defaults>
</compile_context>

<pallas_src>
import jax
import jax.numpy as jnp
from jax.experimental import pallas as pl
from jax.experimental.pallas import tpu as pltpu


# ----------------------------- Pallas kernels ------------------------------

def _pool_kernel(x_ref, sum_ref):
    """Row-wise spatial sums. grid = (row_tiles, hw_tiles); axis 1 is the
    reduction axis (the output block is resident across it)."""
    @pl.when(pl.program_id(1) == 0)
    def _():
        sum_ref[...] = jnp.zeros_like(sum_ref)
    # Accumulate in f32 regardless of the input dtype (bf16-safe pooling).
    sum_ref[...] += jnp.sum(x_ref[...].astype(jnp.float32), axis=-1,
                            keepdims=True)


def _scale_kernel(x_ref, s_ref, o_ref):
    """Pure broadcast multiply: out = x * per-row scale."""
    x = x_ref[...].astype(jnp.float32)          # (tr, tc)
    o_ref[...] = (x * s_ref[...]).astype(o_ref.dtype)   # s_ref: (tr, 1) f32


# ------------------------------ tiling helpers ------------------------------

def _pick_tile(dim, unit, cap):
    """Largest multiple of `unit` that divides `dim`, capped at `cap`.
    Falls back to the full extent (always a legal block size)."""
    best = None
    t = unit
    limit = min(dim, cap)
    while t <= limit:
        if dim % t == 0:
            best = t
        t += unit
    return best if best is not None else dim


def _vmem_limit_bytes(*tile_bytes):
    """Double-buffered tile footprint + slack, clamped to [32 MiB, 64 MiB]
    so it is legal on every generation (v7x physical VMEM is 64 MiB)."""
    need = 2 * sum(tile_bytes) + (1 << 20)
    return int(min(64 * 1024 * 1024, max(need, 32 * 1024 * 1024)))


# --------------------------------- wrapper ----------------------------------

def se_layer(x_nchw, w1, b1, w2, b2):
    """x_nchw: (N, C, H, W); w1: (S, C); b1: (S, 1); w2: (C, S); b2: (C, 1)."""
    N, C, H, W = x_nchw.shape
    HW = H * W
    rows = N * C
    x2d = x_nchw.reshape(rows, HW)

    tr = _pick_tile(rows, 8, 512)      # sublane tile
    tc = _pick_tile(HW, 128, 2048)     # lane tile (multiple of 128 when possible)
    g_rows = rows // tr
    g_hw = HW // tc
    x_tile_bytes = tr * tc * x2d.dtype.itemsize

    # --- squeeze: tiled spatial-sum reduction (Pallas) ---
    row_sums = pl.pallas_call(
        _pool_kernel,
        out_shape=jax.ShapeDtypeStruct((rows, 1), jnp.float32),
        grid=(g_rows, g_hw),
        in_specs=[pl.BlockSpec((tr, tc), lambda i, j: (i, j))],
        out_specs=pl.BlockSpec((tr, 1), lambda i, j: (i, 0)),
        compiler_params=pltpu.CompilerParams(
            dimension_semantics=("parallel", "arbitrary"),
            vmem_limit_bytes=_vmem_limit_bytes(x_tile_bytes)),
    )(x2d)

    # --- excitation MLP: O(N*C*S) FLOPs, negligible -> plain JAX/XLA ---
    pooled = row_sums.reshape(N, C) * (1.0 / HW)                 # (N, C) f32
    h = jnp.maximum(pooled @ w1.T.astype(jnp.float32) + b1[:, 0], 0.0)
    scale = jax.nn.sigmoid(h @ w2.T.astype(jnp.float32) + b2[:, 0])  # (N, C)
    scale2d = scale.reshape(rows, 1).astype(jnp.float32)

    # --- excite: lane-dense broadcast multiply (Pallas) ---
    out2d = pl.pallas_call(
        _scale_kernel,
        out_shape=jax.ShapeDtypeStruct((rows, HW), x2d.dtype),
        grid=(g_rows, g_hw),
        in_specs=[pl.BlockSpec((tr, tc), lambda i, j: (i, j)),
                  pl.BlockSpec((tr, 1), lambda i, j: (i, 0))],
        out_specs=pl.BlockSpec((tr, tc), lambda i, j: (i, j)),
        compiler_params=pltpu.CompilerParams(
            dimension_semantics=("parallel", "parallel"),
            vmem_limit_bytes=_vmem_limit_bytes(2 * x_tile_bytes)),
    )(x2d, scale2d)

    return out2d.reshape(N, C, H, W)


def se_layer_ref(x_nchw, w1, b1, w2, b2):
    """Pure-JAX reference matching the PyTorch SElayer forward."""
    pooled = jnp.mean(x_nchw, axis=(2, 3))                       # (N, C)
    h = jnp.maximum(pooled @ w1.T + b1[:, 0], 0.0)               # (N, S)
    s = jax.nn.sigmoid(h @ w2.T + b2[:, 0])                      # (N, C)
    return x_nchw * s[:, :, None, None]


if __name__ == "__main__":
    # Small shapes consistent with SElayer(input_channels=8, squeeze_channels=2)
    N, C, S, H, W = 2, 8, 2, 16, 16

    key = jax.random.PRNGKey(0)
    kx, kw1, kb1, kw2, kb2 = jax.random.split(key, 5)

    x = jax.random.normal(kx, (N, C, H, W), dtype=jnp.float32)
    # Conv2d 1x1 weights -> 2D matrices.
    w1 = jax.random.normal(kw1, (S, C), dtype=jnp.float32) * 0.1   # fc1.weight
    b1 = jax.random.normal(kb1, (S, 1), dtype=jnp.float32) * 0.1   # fc1.bias
    w2 = jax.random.normal(kw2, (C, S), dtype=jnp.float32) * 0.1   # fc2.weight
    b2 = jax.random.normal(kb2, (C, 1), dtype=jnp.float32) * 0.1   # fc2.bias

    out = se_layer(x, w1, b1, w2, b2)
    out = jax.block_until_ready(out)

    ref = se_layer_ref(x, w1, b1, w2, b2)
    assert out.shape == (N, C, H, W)
    assert jnp.allclose(out, ref, atol=1e-5, rtol=1e-5), "mismatch vs reference"

    print("KERNEL_OK")
</pallas_src>

<mosaic_0001>
module attributes {stable_mosaic.version = 11 : i64} {
  func.func @_pool_kernel(%arg0: i32, %arg1: i32, %arg2: memref<16x256xf32, #tpu.memory_space<vmem>>, %arg3: memref<16x1xf32, #tpu.memory_space<vmem>>) attributes {dimension_semantics = [#tpu.dimension_semantics<parallel>, #tpu.dimension_semantics<arbitrary>], iteration_bounds = array<i64: 1, 1>, scalar_prefetch = 0 : i64, scratch_operands = 0 : i64, tpu.core_type = #tpu.core_type<tc>, window_params = [{transform_indices = @transform_0, window_bounds = array<i64: 16, 256>}, {transform_indices = @transform_1, window_bounds = array<i64: 16, 1>}]} {
    %c0_i32 = arith.constant 0 : i32
    %0 = arith.cmpi eq, %arg1, %c0_i32 : i32
    %1 = arith.extui %0 : i1 to i32
    %c0_i32_0 = arith.constant 0 : i32
    %2 = arith.cmpi ne, %1, %c0_i32_0 : i32
    scf.if %2 {
      %cst_6 = arith.constant 0.000000e+00 : f32
      %9 = vector.broadcast %cst_6 : f32 to vector<16x1xf32>
      %c0_7 = arith.constant 0 : index
      %c0_8 = arith.constant 0 : index
      %10 = vector.load %arg3[%c0_7, %c0_8] : memref<16x1xf32, #tpu.memory_space<vmem>>, vector<16x1xf32>
      tpu.vector_store %arg3[%c0_7, %c0_8], %9 {strides = array<i32>} : memref<16x1xf32, #tpu.memory_space<vmem>>, vector<16x1xf32>,
    } else {
    }
    %c0 = arith.constant 0 : index
    %c0_1 = arith.constant 0 : index
    %3 = vector.load %arg3[%c0, %c0_1] : memref<16x1xf32, #tpu.memory_space<vmem>>, vector<16x1xf32>
    %c0_2 = arith.constant 0 : index
    %c0_3 = arith.constant 0 : index
    %4 = vector.load %arg2[%c0_2, %c0_3] : memref<16x256xf32, #tpu.memory_space<vmem>>, vector<16x256xf32>
    %cst = arith.constant dense<0.000000e+00> : vector<16xf32>
    %5 = vector.multi_reduction <add>, %4, %cst [1] : vector<16x256xf32> to vector<16xf32>
    %6 = vector.shape_cast %5 : vector<16xf32> to vector<16x1xf32>
    %7 = arith.addf %3, %6 : vector<16x1xf32>
    %c0_4 = arith.constant 0 : index
    %c0_5 = arith.constant 0 : index
    %8 = vector.load %arg3[%c0_4, %c0_5] : memref<16x1xf32, #tpu.memory_space<vmem>>, vector<16x1xf32>
    tpu.vector_store %arg3[%c0_4, %c0_5], %7 {strides = array<i32>} : memref<16x1xf32, #tpu.memory_space<vmem>>, vector<16x1xf32>,
    return
  }
  func.func @transform_0(%arg0: i32, %arg1: i32) -> (i32, i32) {
    %c0_i32 = arith.constant 0 : i32
    return %arg0, %arg1 : i32, i32
  }
  func.func @transform_1(%arg0: i32, %arg1: i32) -> (i32, i32) {
    %c0_i32 = arith.constant 0 : i32
    %c0_i32_0 = arith.constant 0 : i32
    return %arg0, %c0_i32 : i32, i32
  }
}

</mosaic_0001>

<llo_original>
// kernel: tpu_custom_call.1
$region0: #{tpu_custom_call.1}
  #allocation0 [shape = 'u32[]', space=smem, size = 0x4, offset = 0x4, fixed_abs, tag = 'smem constant byte address 0x4 - core index']
  #allocation1 [shape = 'u32[144,128]{1,0:T(1,128)}', space=vmem, size = 0x12000, scoped, tag = 'internal scratch']
  %s0 = inlined_call_operand.hbm [shape: f32[16,256], index: 0, kind: input, shape index: {}]
  %s1 = inlined_call_operand.vmem [shape: f32[16,1], index: 1, kind: output, shape index: {}]
  %s2 = sld [smem:[#allocation0]]
  $region22: #{tpu_custom_call.1} parent=0
    _
  %s4 = ssub.s32 1, %s2
  %s5 = scalar_select 0, %s4, %s2
  $region1: #{tpu_custom_call.1} parent=0
    #allocation2 [shape = 'u8[16384]{0}', space=vmem, size = 0x4000, scoped, tag = 'input window, operand 0, single buffered']
    #allocation3 [shape = 's32[1]{0}', space=sflag, size = 0x4, scoped, tag = 'scoped memory for tpu_custom_call.1']
    %6 = vsyncpa [#allocation3], 0
    // Predicated region
    $region2: #{tpu_custom_call.1} parent=1 // pred_check
      _
    $region3: #{tpu_custom_call.1} parent=1 // pred_check_branch
      %8 = sbr.rel (0) target = $region5
    $region4: #{tpu_custom_call.1} parent=1 // pred_region
      %s10 = ssub.s32 512, 512
      %11 = vsyncadd [#allocation3], %s10
      %s12 = sshll.u32 [#allocation2], 4
      %s13 = int_to_ptr.vmem [resolvable:$true] %s12
      %18 = dma.hbm_to_vmem [thread:$0]  %s0, 512, %s13, [#allocation3], 256, 256, 16
    $region5: #{tpu_custom_call.1} parent=1 // pred_fallthru
      _
    // Predicated region
    $region6: #{tpu_custom_call.1} parent=1 // pred_check
      _
    $region7: #{tpu_custom_call.1} parent=1 // pred_check_branch
      %20 = sbr.rel (0) target = $region9
    $region8: #{tpu_custom_call.1} parent=1 // pred_region
      %21 = dma.done [#allocation3], 512
    $region9: #{tpu_custom_call.1} parent=1 // pred_fallthru
      _
    %p22 = scmp.eq.s32.totalorder 0, 0
    // Predicated region
    $region10: #{tpu_custom_call.1} parent=1 // pred_check
      %p23 = pneg %p22
    $region11: #{tpu_custom_call.1} parent=1 // pred_check_branch
      %25 = sbr.rel (%p23) target = $region13
    $region12: #{tpu_custom_call.1} parent=1 // pred_region
      %vm26 = vcmask 7168
      %27 = vst.msk [vmem:[%s1] sm:$0xff] %vm26, 0.0
      %28 = vst.msk [vmem:[%s1 + $0x8] sm:$0xff] %vm26, 0.0
    $region13: #{tpu_custom_call.1} parent=1 // pred_fallthru
      _
    %v29 = vld [vmem:[%s1] sm:$0xff]
    %v30 = vld [vmem:[%s1 + $0x8] sm:$0xff]
    %v31 = vld [vmem:[#allocation2] sm:$0xff]
    %v32 = vld [vmem:[#allocation2 + $0x8] sm:$0xff]
    %v33 = vld [vmem:[#allocation2 + $0x10] sm:$0xff]
    %v34 = vld [vmem:[#allocation2 + $0x18] sm:$0xff]
    %v35 = vadd.f32 %v31, %v32
    %36 = vadd.xlane.f32.xlu0 %v35
    %v37 = vpop.xlane.xlu0 %36
    %v38 = vadd.f32 %v33, %v34
    %39 = vadd.xlane.f32.xlu0 %v38
    %v40 = vpop.xlane.xlu0 %39
    %v41 = vadd.f32 %v29, %v37
    %v42 = vadd.f32 %v30, %v40
    %vm43 = vcmask 7168
    %44 = vst.msk [vmem:[%s1] sm:$0xff] %vm43, %v41
    %45 = vst.msk [vmem:[%s1 + $0x8] sm:$0xff] %vm43, %v42
    // Predicated region
    $region14: #{tpu_custom_call.1} parent=1 // pred_check
      _
    $region15: #{tpu_custom_call.1} parent=1 // pred_check_branch
      %47 = sbr.rel (0) target = $region17
    $region16: #{tpu_custom_call.1} parent=1 // pred_region
      _
    $region17: #{tpu_custom_call.1} parent=1 // pred_fallthru
      _
    // Predicated region
    $region18: #{tpu_custom_call.1} parent=1 // pred_check
      _
    $region19: #{tpu_custom_call.1} parent=1 // pred_check_branch
      %49 = sbr.rel (0) target = $region21
    $region20: #{tpu_custom_call.1} parent=1 // pred_region
      _
    $region21: #{tpu_custom_call.1} parent=1 // pred_fallthru
      _
    %50 = vsyncpa [#allocation3], 1

</llo_original>
